<compile_context>
chip_gen: v6e
topology: v6e:2x2x1
jax: 0.10.0
libtpu: 0.0.40
codegen_flags: <defaults>
</compile_context>

<pallas_src>
import functools

import jax
import jax.numpy as jnp
from jax import lax
from jax.experimental import pallas as pl
from jax.experimental.pallas import tpu as pltpu

EPS = 1e-5  # nn.BatchNorm2d default eps


def _cond_norm_kernel(x_ref, gamma_ref, beta_ref, o_ref,
                      sum_ref, sumsq_ref, mean_ref, inv_std_ref,
                      *, inv_count, acc_lanes):
    # x_ref:       (N, Ct, HWt)   input tile (input dtype)
    # gamma_ref:   (N, Ct, 1)     per-sample conditional scale (resident per c tile)
    # beta_ref:    (N, Ct, 1)     per-sample conditional shift
    # o_ref:       (N, Ct, HWt)
    # sum_ref:     (Ct, acc_lanes) f32   lane-dense partial sums
    # sumsq_ref:   (Ct, acc_lanes) f32   lane-dense partial sums of squares
    # mean_ref:    (Ct, 1) f32
    # inv_std_ref: (Ct, 1) f32
    p = pl.program_id(1)          # 0 = statistics pass, 1 = normalize pass
    t = pl.program_id(2)          # spatial (H*W) tile index
    nt = pl.num_programs(2)

    @pl.when((p == 0) & (t == 0))
    def _init():
        sum_ref[...] = jnp.zeros_like(sum_ref)
        sumsq_ref[...] = jnp.zeros_like(sumsq_ref)

    @pl.when(p == 0)
    def _accumulate():
        xf = x_ref[...].astype(jnp.float32)                 # (N, Ct, HWt)
        # Reduce over N (outer dim -> plain vreg adds, no XLU).
        s_n = jnp.sum(xf, axis=0)                           # (Ct, HWt)
        q_n = jnp.sum(xf * xf, axis=0)                      # (Ct, HWt)
        hw_t = xf.shape[2]
        # Fold 128-lane groups with element-wise adds (128-aligned static slices).
        s_part = s_n[:, 0:acc_lanes]
        q_part = q_n[:, 0:acc_lanes]
        for g in range(1, hw_t // acc_lanes):
            s_part = s_part + s_n[:, g * acc_lanes:(g + 1) * acc_lanes]
            q_part = q_part + q_n[:, g * acc_lanes:(g + 1) * acc_lanes]
        sum_ref[...] += s_part
        sumsq_ref[...] += q_part

    @pl.when((p == 0) & (t == nt - 1))
    def _finalize_stats():
        # Single cross-lane (XLU) reduce per quantity, once per channel tile.
        total = jnp.sum(sum_ref[...], axis=1, keepdims=True)      # (Ct, 1)
        totsq = jnp.sum(sumsq_ref[...], axis=1, keepdims=True)    # (Ct, 1)
        mean = total * inv_count
        var = jnp.maximum(totsq * inv_count - mean * mean, 0.0)   # biased (training) var
        mean_ref[...] = mean
        inv_std_ref[...] = lax.rsqrt(var + EPS)

    @pl.when(p == 1)
    def _normalize():
        xf = x_ref[...].astype(jnp.float32)                       # (N, Ct, HWt)
        gamma = gamma_ref[...].astype(jnp.float32)                # (N, Ct, 1)
        beta = beta_ref[...].astype(jnp.float32)
        scale = gamma * inv_std_ref[...]                          # fold BN + affine
        bias = beta - mean_ref[...] * scale
        o_ref[...] = (xf * scale + bias).astype(o_ref.dtype)


def _pick_tile(dim, multiple, cap):
    """Largest divisor of `dim` that is a multiple of `multiple` and <= cap,
    else the full extent (always a legal TPU block size)."""
    if dim <= cap:
        return dim
    t = (min(cap, dim) // multiple) * multiple
    while t >= multiple:
        if dim % t == 0:
            return t
        t -= multiple
    return dim


def conditional_norm(x_nchw, class_id, embed_weight, *, c_tile=None, hw_tile=None,
                     vmem_budget_bytes=40 * 1024 * 1024):
    """x_nchw: (N, C, H, W); class_id: (N,) int; embed_weight: (n_class, 2C)."""
    N, C, H, W = x_nchw.shape
    HW = H * W
    esize = jnp.dtype(x_nchw.dtype).itemsize
    # Dtype-aware sublane multiple (packed sublanes): f32 -> 8, bf16 -> 16, int8/fp8 -> 32.
    sub = {4: 8, 2: 16, 1: 32}.get(esize, 8)

    # Free reshape (collapses contiguous dims), NO transpose: kernel keeps NCHW layout.
    x = x_nchw.reshape(N, C, HW)

    # Embedding gather + chunk (tiny (N, 2C) parameter setup, done once in XLA).
    embed = embed_weight[class_id]                       # (N, 2C)
    gamma = embed[:, :C].reshape(N, C, 1).astype(jnp.float32)
    beta = embed[:, C:].reshape(N, C, 1).astype(jnp.float32)

    def _usage(ct, hwt):
        """Total VMEM bytes: double-buffered x in/out blocks, double-buffered
        gamma/beta blocks (last dim pads to 128 lanes), and scratch."""
        acc_l = 128 if hwt % 128 == 0 else hwt
        xio = 4 * N * ct * hwt * esize                   # 2x in + 2x out blocks
        gb = 4 * N * ct * 128 * 4                        # gamma + beta blocks, lane-padded
        scr = (2 * ct * acc_l + 2 * ct * 128) * 4        # sum/sumsq + mean/inv_std
        return xio + gb + scr

    if c_tile is None:
        c_tile = _pick_tile(C, sub, 128)
        # v7x has 2 TensorCores: ensure >= 2 channel tiles when C allows so the
        # "parallel" grid axis can be sharded across both cores.
        if c_tile == C and C % (2 * sub) == 0:
            c_tile = C // 2

    if hw_tile is None:
        while True:
            if _usage(c_tile, HW) <= vmem_budget_bytes:
                # Resident slab: 1 hw tile -> pass 1 reuses the pass-0 x block,
                # x is DMA'd from HBM exactly once.
                hw_tile = HW
                break
            fixed = 4 * N * c_tile * 128 * 4 + 4 * c_tile * 128 * 4
            hw_cap = (vmem_budget_bytes - fixed) // max(1, 4 * N * c_tile * esize)
            hw_cap = (hw_cap // 128) * 128
            if hw_cap >= 512 or c_tile == C or c_tile <= sub:
                hw_tile = _pick_tile(HW, 128, max(hw_cap, 128))
                break
            # Prefer shrinking c_tile over letting hw_tile fall below 512 lanes.
            new_c = _pick_tile(C, sub, c_tile // 2)
            if new_c in (c_tile, C):
                hw_tile = _pick_tile(HW, 128, max(hw_cap, 128))
                break
            c_tile = new_c

    assert C % c_tile == 0 and HW % hw_tile == 0
    n_c_tiles = C // c_tile
    n_hw_tiles = HW // hw_tile
    acc_lanes = 128 if hw_tile % 128 == 0 else hw_tile
    inv_count = 1.0 / float(N * HW)

    vmem_limit = int(min(128 * 1024 * 1024,
                         max(48 * 1024 * 1024, _usage(c_tile, hw_tile) + (8 << 20))))

    kernel = functools.partial(_cond_norm_kernel,
                               inv_count=inv_count, acc_lanes=acc_lanes)

    out = pl.pallas_call(
        kernel,
        out_shape=jax.ShapeDtypeStruct((N, C, HW), x_nchw.dtype),
        grid_spec=pltpu.PrefetchScalarGridSpec(
            num_scalar_prefetch=0,
            # (channel tiles, pass, spatial tiles); pass 0 = stats, pass 1 = normalize.
            grid=(n_c_tiles, 2, n_hw_tiles),
            in_specs=[
                pl.BlockSpec((N, c_tile, hw_tile), lambda c, p, t: (0, c, t)),
                pl.BlockSpec((N, c_tile, 1), lambda c, p, t: (0, c, 0)),
                pl.BlockSpec((N, c_tile, 1), lambda c, p, t: (0, c, 0)),
            ],
            # During pass 0 every step maps to the block that pass 1 writes first,
            # so nothing is written back to HBM before it holds valid data.
            out_specs=pl.BlockSpec((N, c_tile, hw_tile),
                                   lambda c, p, t: (0, c, t * p)),
            scratch_shapes=[
                pltpu.VMEM((c_tile, acc_lanes), jnp.float32),  # lane-dense partial sums
                pltpu.VMEM((c_tile, acc_lanes), jnp.float32),  # lane-dense partial sum sq
                pltpu.VMEM((c_tile, 1), jnp.float32),          # per-channel mean
                pltpu.VMEM((c_tile, 1), jnp.float32),          # per-channel inv_std
            ],
        ),
        compiler_params=pltpu.CompilerParams(
            # Channel tiles are fully independent -> shard across TensorCores (v7x).
            dimension_semantics=("parallel", "arbitrary", "arbitrary"),
            vmem_limit_bytes=vmem_limit),
    )(x, gamma, beta)

    return out.reshape(N, C, H, W)


def reference_conditional_norm(x_nchw, class_id, embed_weight):
    """Pure-JAX reference matching PyTorch semantics (training-mode BN)."""
    N, C, H, W = x_nchw.shape
    x = x_nchw.astype(jnp.float32)
    mean = jnp.mean(x, axis=(0, 2, 3), keepdims=True)
    var = jnp.mean((x - mean) ** 2, axis=(0, 2, 3), keepdims=True)  # biased
    out = (x - mean) / jnp.sqrt(var + EPS)
    embed = embed_weight[class_id].astype(jnp.float32)
    gamma = embed[:, :C][:, :, None, None]
    beta = embed[:, C:][:, :, None, None]
    return (gamma * out + beta).astype(x_nchw.dtype)


def _make_embed(key, n_class, C):
    base = jnp.concatenate(
        [jnp.ones((n_class, C), jnp.float32), jnp.zeros((n_class, C), jnp.float32)],
        axis=1)
    return base + 0.1 * jax.random.normal(key, (n_class, 2 * C), dtype=jnp.float32)


if __name__ == "__main__":
    key = jax.random.PRNGKey(0)
    k1, k2, k3, k4, k5, k6, k7 = jax.random.split(key, 7)
    n_class = 10

    # --- Test 1: module-default small shapes, default tiling (resident slab path,
    #     single hw tile, 2 lane groups folded into the 128-wide partials). ---
    N, C, H, W = 2, 4, 16, 16
    x = jax.random.normal(k1, (N, C, H, W), dtype=jnp.float32)
    class_id = jax.random.randint(k2, (N,), 0, n_class, dtype=jnp.int32)
    embed_weight = _make_embed(k3, n_class, C)

    out = jax.block_until_ready(conditional_norm(x, class_id, embed_weight))
    ref = reference_conditional_norm(x, class_id, embed_weight)
    assert out.shape == (N, C, H, W)
    assert jnp.allclose(out, ref, atol=1e-4, rtol=1e-4)

    # --- Test 2: same shapes, forced spatial tiling (2 hw tiles -> exercises the
    #     multi-tile accumulation + second read of x path). ---
    out_t = jax.block_until_ready(
        conditional_norm(x, class_id, embed_weight, hw_tile=128))
    assert jnp.allclose(out_t, ref, atol=1e-4, rtol=1e-4)

    # --- Test 3: more channels, forced channel tiling (2 parallel C tiles),
    #     HW < 128 (full-extent lane tile). ---
    N2, C2, H2, W2 = 2, 16, 8, 8
    x2 = jax.random.normal(k4, (N2, C2, H2, W2), dtype=jnp.float32)
    class_id2 = jax.random.randint(k5, (N2,), 0, n_class, dtype=jnp.int32)
    embed_weight2 = _make_embed(k3, n_class, C2)

    out2 = jax.block_until_ready(
        conditional_norm(x2, class_id2, embed_weight2, c_tile=8))
    ref2 = reference_conditional_norm(x2, class_id2, embed_weight2)
    assert out2.shape == (N2, C2, H2, W2)
    assert jnp.allclose(out2, ref2, atol=1e-4, rtol=1e-4)

    # --- Test 4: bf16 activations -> dtype-aware sublane tiling (multiple of 16)
    #     and automatic split into 2 channel tiles. ---
    N3, C3, H3, W3 = 2, 32, 8, 8
    x3 = jax.random.normal(k6, (N3, C3, H3, W3), dtype=jnp.float32).astype(jnp.bfloat16)
    class_id3 = jax.random.randint(k7, (N3,), 0, n_class, dtype=jnp.int32)
    embed_weight3 = _make_embed(k3, n_class, C3)

    out3 = jax.block_until_ready(conditional_norm(x3, class_id3, embed_weight3))
    ref3 = reference_conditional_norm(x3, class_id3, embed_weight3)
    assert out3.shape == (N3, C3, H3, W3)
    assert jnp.allclose(out3.astype(jnp.float32), ref3.astype(jnp.float32),
                        atol=3e-2, rtol=3e-2)

    print("KERNEL_OK")
</pallas_src>

<mosaic_0001>
module attributes {stable_mosaic.version = 11 : i64} {
  func.func @_cond_norm_kernel(%arg0: i32, %arg1: i32, %arg2: i32, %arg3: memref<2x4x256xf32, #tpu.memory_space<vmem>>, %arg4: memref<2x4x1xf32, #tpu.memory_space<vmem>>, %arg5: memref<2x4x1xf32, #tpu.memory_space<vmem>>, %arg6: memref<2x4x256xf32, #tpu.memory_space<vmem>>, %arg7: memref<4x128xf32, #tpu.memory_space<vmem>>, %arg8: memref<4x128xf32, #tpu.memory_space<vmem>>, %arg9: memref<4x1xf32, #tpu.memory_space<vmem>>, %arg10: memref<4x1xf32, #tpu.memory_space<vmem>>) attributes {dimension_semantics = [#tpu.dimension_semantics<parallel>, #tpu.dimension_semantics<arbitrary>, #tpu.dimension_semantics<arbitrary>], iteration_bounds = array<i64: 1, 2, 1>, scalar_prefetch = 0 : i64, scratch_operands = 4 : i64, tpu.core_type = #tpu.core_type<tc>, window_params = [{transform_indices = @transform_0, window_bounds = array<i64: 2, 4, 256>}, {transform_indices = @transform_1, window_bounds = array<i64: 2, 4, 1>}, {transform_indices = @transform_2, window_bounds = array<i64: 2, 4, 1>}, {transform_indices = @transform_3, window_bounds = array<i64: 2, 4, 256>}]} {
    %c0_i32 = arith.constant 0 : i32
    %0 = arith.cmpi eq, %arg1, %c0_i32 : i32
    %c0_i32_0 = arith.constant 0 : i32
    %1 = arith.cmpi eq, %arg2, %c0_i32_0 : i32
    %2 = arith.andi %0, %1 : i1
    %3 = arith.extui %2 : i1 to i32
    %c0_i32_1 = arith.constant 0 : i32
    %4 = arith.cmpi ne, %3, %c0_i32_1 : i32
    scf.if %4 {
      %cst = arith.constant 0.000000e+00 : f32
      %16 = vector.broadcast %cst : f32 to vector<4x128xf32>
      %c0 = arith.constant 0 : index
      %c0_8 = arith.constant 0 : index
      %17 = vector.load %arg7[%c0, %c0_8] : memref<4x128xf32, #tpu.memory_space<vmem>>, vector<4x128xf32>
      tpu.vector_store %arg7[%c0, %c0_8], %16 {strides = array<i32>} : memref<4x128xf32, #tpu.memory_space<vmem>>, vector<4x128xf32>,
      %cst_9 = arith.constant 0.000000e+00 : f32
      %18 = vector.broadcast %cst_9 : f32 to vector<4x128xf32>
      %c0_10 = arith.constant 0 : index
      %c0_11 = arith.constant 0 : index
      %19 = vector.load %arg8[%c0_10, %c0_11] : memref<4x128xf32, #tpu.memory_space<vmem>>, vector<4x128xf32>
      tpu.vector_store %arg8[%c0_10, %c0_11], %18 {strides = array<i32>} : memref<4x128xf32, #tpu.memory_space<vmem>>, vector<4x128xf32>,
    } else {
    }
    %c0_i32_2 = arith.constant 0 : i32
    %5 = arith.cmpi eq, %arg1, %c0_i32_2 : i32
    %6 = arith.extui %5 : i1 to i32
    %c0_i32_3 = arith.constant 0 : i32
    %7 = arith.cmpi ne, %6, %c0_i32_3 : i32
    scf.if %7 {
      %c0 = arith.constant 0 : index
      %c0_8 = arith.constant 0 : index
      %c0_9 = arith.constant 0 : index
      %16 = vector.load %arg3[%c0, %c0_8, %c0_9] : memref<2x4x256xf32, #tpu.memory_space<vmem>>, vector<2x4x256xf32>
      %cst = arith.constant dense<0.000000e+00> : vector<4x256xf32>
      %17 = vector.multi_reduction <add>, %16, %cst [0] : vector<2x4x256xf32> to vector<4x256xf32>
      %18 = arith.mulf %16, %16 : vector<2x4x256xf32>
      %cst_10 = arith.constant dense<0.000000e+00> : vector<4x256xf32>
      %19 = vector.multi_reduction <add>, %18, %cst_10 [0] : vector<2x4x256xf32> to vector<4x256xf32>
      %20 = vector.extract_strided_slice %17 {offsets = [0, 0], sizes = [4, 128], strides = [1, 1]} : vector<4x256xf32> to vector<4x128xf32>
      %21 = vector.extract_strided_slice %19 {offsets = [0, 0], sizes = [4, 128], strides = [1, 1]} : vector<4x256xf32> to vector<4x128xf32>
      %22 = vector.extract_strided_slice %17 {offsets = [0, 128], sizes = [4, 128], strides = [1, 1]} : vector<4x256xf32> to vector<4x128xf32>
      %23 = arith.addf %20, %22 : vector<4x128xf32>
      %24 = vector.extract_strided_slice %19 {offsets = [0, 128], sizes = [4, 128], strides = [1, 1]} : vector<4x256xf32> to vector<4x128xf32>
      %25 = arith.addf %21, %24 : vector<4x128xf32>
      %c0_11 = arith.constant 0 : index
      %c0_12 = arith.constant 0 : index
      %26 = vector.load %arg7[%c0_11, %c0_12] : memref<4x128xf32, #tpu.memory_space<vmem>>, vector<4x128xf32>
      %27 = arith.addf %26, %23 : vector<4x128xf32>
      %c0_13 = arith.constant 0 : index
      %c0_14 = arith.constant 0 : index
      %28 = vector.load %arg7[%c0_13, %c0_14] : memref<4x128xf32, #tpu.memory_space<vmem>>, vector<4x128xf32>
      tpu.vector_store %arg7[%c0_13, %c0_14], %27 {strides = array<i32>} : memref<4x128xf32, #tpu.memory_space<vmem>>, vector<4x128xf32>,
      %c0_15 = arith.constant 0 : index
      %c0_16 = arith.constant 0 : index
      %29 = vector.load %arg8[%c0_15, %c0_16] : memref<4x128xf32, #tpu.memory_space<vmem>>, vector<4x128xf32>
      %30 = arith.addf %29, %25 : vector<4x128xf32>
      %c0_17 = arith.constant 0 : index
      %c0_18 = arith.constant 0 : index
      %31 = vector.load %arg8[%c0_17, %c0_18] : memref<4x128xf32, #tpu.memory_space<vmem>>, vector<4x128xf32>
      tpu.vector_store %arg8[%c0_17, %c0_18], %30 {strides = array<i32>} : memref<4x128xf32, #tpu.memory_space<vmem>>, vector<4x128xf32>,
    } else {
    }
    %c0_i32_4 = arith.constant 0 : i32
    %8 = arith.cmpi eq, %arg1, %c0_i32_4 : i32
    %c0_i32_5 = arith.constant 0 : i32
    %9 = arith.cmpi eq, %arg2, %c0_i32_5 : i32
    %10 = arith.andi %8, %9 : i1
    %11 = arith.extui %10 : i1 to i32
    %c0_i32_6 = arith.constant 0 : i32
    %12 = arith.cmpi ne, %11, %c0_i32_6 : i32
    scf.if %12 {
      %c0 = arith.constant 0 : index
      %c0_8 = arith.constant 0 : index
      %16 = vector.load %arg7[%c0, %c0_8] : memref<4x128xf32, #tpu.memory_space<vmem>>, vector<4x128xf32>
      %cst = arith.constant dense<0.000000e+00> : vector<4xf32>
      %17 = vector.multi_reduction <add>, %16, %cst [1] : vector<4x128xf32> to vector<4xf32>
      %18 = vector.shape_cast %17 : vector<4xf32> to vector<4x1xf32>
      %c0_9 = arith.constant 0 : index
      %c0_10 = arith.constant 0 : index
      %19 = vector.load %arg8[%c0_9, %c0_10] : memref<4x128xf32, #tpu.memory_space<vmem>>, vector<4x128xf32>
      %cst_11 = arith.constant dense<0.000000e+00> : vector<4xf32>
      %20 = vector.multi_reduction <add>, %19, %cst_11 [1] : vector<4x128xf32> to vector<4xf32>
      %21 = vector.shape_cast %20 : vector<4xf32> to vector<4x1xf32>
      %cst_12 = arith.constant 0.001953125 : f32
      %22 = vector.broadcast %cst_12 : f32 to vector<4x1xf32>
      %23 = arith.mulf %18, %22 : vector<4x1xf32>
      %cst_13 = arith.constant 0.001953125 : f32
      %24 = vector.broadcast %cst_13 : f32 to vector<4x1xf32>
      %25 = arith.mulf %21, %24 : vector<4x1xf32>
      %26 = arith.mulf %23, %23 : vector<4x1xf32>
      %27 = arith.subf %25, %26 : vector<4x1xf32>
      %cst_14 = arith.constant 0.000000e+00 : f32
      %28 = vector.broadcast %cst_14 : f32 to vector<4x1xf32>
      %29 = arith.maximumf %27, %28 : vector<4x1xf32>
      %c0_15 = arith.constant 0 : index
      %c0_16 = arith.constant 0 : index
      %30 = vector.load %arg9[%c0_15, %c0_16] : memref<4x1xf32, #tpu.memory_space<vmem>>, vector<4x1xf32>
      tpu.vector_store %arg9[%c0_15, %c0_16], %23 {strides = array<i32>} : memref<4x1xf32, #tpu.memory_space<vmem>>, vector<4x1xf32>,
      %cst_17 = arith.constant 9.99999974E-6 : f32
      %31 = vector.broadcast %cst_17 : f32 to vector<4x1xf32>
      %32 = arith.addf %29, %31 : vector<4x1xf32>
      %33 = math.rsqrt %32 : vector<4x1xf32>
      %c0_18 = arith.constant 0 : index
      %c0_19 = arith.constant 0 : index
      %34 = vector.load %arg10[%c0_18, %c0_19] : memref<4x1xf32, #tpu.memory_space<vmem>>, vector<4x1xf32>
      tpu.vector_store %arg10[%c0_18, %c0_19], %33 {strides = array<i32>} : memref<4x1xf32, #tpu.memory_space<vmem>>, vector<4x1xf32>,
    } else {
    }
    %c1_i32 = arith.constant 1 : i32
    %13 = arith.cmpi eq, %arg1, %c1_i32 : i32
    %14 = arith.extui %13 : i1 to i32
    %c0_i32_7 = arith.constant 0 : i32
    %15 = arith.cmpi ne, %14, %c0_i32_7 : i32
    scf.if %15 {
      %c0 = arith.constant 0 : index
      %c0_8 = arith.constant 0 : index
      %c0_9 = arith.constant 0 : index
      %16 = vector.load %arg3[%c0, %c0_8, %c0_9] : memref<2x4x256xf32, #tpu.memory_space<vmem>>, vector<2x4x256xf32>
      %c0_10 = arith.constant 0 : index
      %c0_11 = arith.constant 0 : index
      %c0_12 = arith.constant 0 : index
      %17 = vector.load %arg4[%c0_10, %c0_11, %c0_12] : memref<2x4x1xf32, #tpu.memory_space<vmem>>, vector<2x4x1xf32>
      %c0_13 = arith.constant 0 : index
      %c0_14 = arith.constant 0 : index
      %c0_15 = arith.constant 0 : index
      %18 = vector.load %arg5[%c0_13, %c0_14, %c0_15] : memref<2x4x1xf32, #tpu.memory_space<vmem>>, vector<2x4x1xf32>
      %c0_16 = arith.constant 0 : index
      %c0_17 = arith.constant 0 : index
      %19 = vector.load %arg10[%c0_16, %c0_17] : memref<4x1xf32, #tpu.memory_space<vmem>>, vector<4x1xf32>
      %20 = vector.shape_cast %19 : vector<4x1xf32> to vector<1x4x1xf32>
      %21 = vector.broadcast %20 : vector<1x4x1xf32> to vector<2x4x1xf32>
      %22 = arith.mulf %17, %21 : vector<2x4x1xf32>
      %c0_18 = arith.constant 0 : index
      %c0_19 = arith.constant 0 : index
      %23 = vector.load %arg9[%c0_18, %c0_19] : memref<4x1xf32, #tpu.memory_space<vmem>>, vector<4x1xf32>
      %24 = vector.shape_cast %23 : vector<4x1xf32> to vector<1x4x1xf32>
      %25 = vector.broadcast %24 : vector<1x4x1xf32> to vector<2x4x1xf32>
      %26 = arith.mulf %25, %22 : vector<2x4x1xf32>
      %27 = arith.subf %18, %26 : vector<2x4x1xf32>
      %28 = vector.broadcast %22 : vector<2x4x1xf32> to vector<2x4x256xf32>
      %29 = arith.mulf %16, %28 : vector<2x4x256xf32>
      %30 = vector.broadcast %27 : vector<2x4x1xf32> to vector<2x4x256xf32>
      %31 = arith.addf %29, %30 : vector<2x4x256xf32>
      %c0_20 = arith.constant 0 : index
      %c0_21 = arith.constant 0 : index
      %c0_22 = arith.constant 0 : index
      %32 = vector.load %arg6[%c0_20, %c0_21, %c0_22] : memref<2x4x256xf32, #tpu.memory_space<vmem>>, vector<2x4x256xf32>
      tpu.vector_store %arg6[%c0_20, %c0_21, %c0_22], %31 {strides = array<i32>} : memref<2x4x256xf32, #tpu.memory_space<vmem>>, vector<2x4x256xf32>,
    } else {
    }
    return
  }
  func.func @transform_0(%arg0: i32, %arg1: i32, %arg2: i32) -> (i32, i32, i32) {
    %c0_i32 = arith.constant 0 : i32
    %c0_i32_0 = arith.constant 0 : i32
    return %c0_i32, %arg0, %arg2 : i32, i32, i32
  }
  func.func @transform_1(%arg0: i32, %arg1: i32, %arg2: i32) -> (i32, i32, i32) {
    %c0_i32 = arith.constant 0 : i32
    %c0_i32_0 = arith.constant 0 : i32
    %c0_i32_1 = arith.constant 0 : i32
    return %c0_i32, %arg0, %c0_i32_0 : i32, i32, i32
  }
  func.func @transform_2(%arg0: i32, %arg1: i32, %arg2: i32) -> (i32, i32, i32) {
    %c0_i32 = arith.constant 0 : i32
    %c0_i32_0 = arith.constant 0 : i32
    %c0_i32_1 = arith.constant 0 : i32
    return %c0_i32, %arg0, %c0_i32_0 : i32, i32, i32
  }
  func.func @transform_3(%arg0: i32, %arg1: i32, %arg2: i32) -> (i32, i32, i32) {
    %0 = arith.muli %arg2, %arg1 : i32
    %c0_i32 = arith.constant 0 : i32
    %c0_i32_0 = arith.constant 0 : i32
    return %c0_i32, %arg0, %0 : i32, i32, i32
  }
}

</mosaic_0001>

<llo_original>
// kernel: tpu_custom_call.1
$region0: #{tpu_custom_call.1}
  #allocation0 [shape = 'u32[]', space=smem, size = 0x4, offset = 0x4, fixed_abs, tag = 'smem constant byte address 0x4 - core index']
  #allocation1 [shape = 'u32[144,128]{1,0:T(1,128)}', space=vmem, size = 0x12000, scoped, tag = 'internal scratch']
  #allocation2 [shape = 'f32[4,128]{1,0:T(4,128)}', space=vmem, size = 0x800, scoped, tag = 'scratch operand']
  #allocation3 [shape = 'f32[4,128]{1,0:T(4,128)}', space=vmem, size = 0x800, scoped, tag = 'scratch operand']
  #allocation4 [shape = 'f32[4,1]{1,0:T(4,128)}', space=vmem, size = 0x800, scoped, tag = 'scratch operand']
  #allocation5 [shape = 'f32[4,1]{1,0:T(4,128)}', space=vmem, size = 0x800, scoped, tag = 'scratch operand']
  %s0 = inlined_call_operand.vmem [shape: f32[2,4,256], index: 0, kind: input, shape index: {}]
  %s1 = inlined_call_operand.vmem [shape: f32[2,4,1], index: 1, kind: input, shape index: {}]
  %s2 = inlined_call_operand.vmem [shape: f32[2,4,1], index: 2, kind: input, shape index: {}]
  %s3 = inlined_call_operand.hbm [shape: f32[2,4,256], index: 3, kind: output, shape index: {}]
  %s4 = sld [smem:[#allocation0]]
  $region61: #{tpu_custom_call.1} parent=0
    _
  %s6 = ssub.s32 1, %s4
  %s7 = scalar_select 0, %s6, %s4
  $region1: #{tpu_custom_call.1} parent=0
    #allocation6 [shape = 'u8[16384]{0}', space=vmem, size = 0x4000, scoped, tag = 'output window, operand 0']
    #allocation7 [shape = 's32[2]{0}', space=sflag, size = 0x8, scoped, tag = 'scoped memory for tpu_custom_call.1']
    %8 = vsyncpa [#allocation7], 0
    %s9 = scalar_lea.sflag [#allocation7], 1
    %10 = vsyncpa %s9, 0
    loop: start=0, step=1, limit=4
    $region2: #{tpu_custom_call.1} parent=1 // loop_pre_header
      _
    $region3: #{tpu_custom_call.1} parent=1 // loop_header
      %s12 = sphi 0, %s16
      %p13 = scmp.ge.s32.totalorder %s12, 4
      %s19 = sphi 0, %s38
      %s20 = sphi 0, %s34
      %s21 = sphi 0, %s30
      %s22 = sphi 0, %s19
      %s23 = sphi 0, %s20
      %s24 = sphi 0, %s21
      %s25 = sphi 0, %s22
      %s26 = sphi 0, %s23
      %s27 = sphi 0, %s24
      %s43 = sphi 0, %s45
      %s46 = sphi 0, %s43
      %s47 = sphi 0, %s46
      %s63 = sphi 0, %s47
      %s69 = sphi 0, %s71
      %s72 = sphi 0, %s69
      %s73 = sphi 0, %s72
      %s89 = sphi 0, %s73
      %s95 = sphi 0, %s97
      %s98 = sphi 0, %s95
      %s99 = sphi 0, %s98
      %s115 = sphi 0, %s99
      %s125 = sphi 0, %s127
      %s128 = sphi 0, %s125
      %s129 = sphi 0, %s128
      %s145 = sphi 0, %s129
    $region4: #{tpu_custom_call.1} parent=1 // loop_header_branch
      %15 = sbr.rel (%p13) target = $region8
    $region5: #{tpu_custom_call.1} parent=1 // loop_body
      %s17 = ssub.s32 %s12, 1
      %s18 = ssub.s32 %s12, 2
      %s28 = sadd.s32 1, %s21
      %p29 = scmp.ge.s32.totalorder %s28, 1
      %s30 = scalar_select %p29, 0, %s28
      %s31 = sadd.s32 1, %s20
      %s32 = scalar_select %p29, %s31, %s20
      %p33 = scmp.ge.s32.totalorder %s32, 2
      %s34 = scalar_select %p33, 0, %s32
      %s35 = sadd.s32 1, %s19
      %s36 = scalar_select %p33, %s35, %s19
      %p37 = scmp.ge.s32.totalorder %s36, 1
      %s38 = scalar_select %p37, 0, %s36
      %s39 = ssub.s32 %s19, %s38
      %s40 = ssub.s32 %s21, %s30
      %s41 = sor.u32 %s39, %s40
      %p42 = scmp.eq.s32.totalorder %s41, 0
      %s44 = sadd.s32 %s43, 1
      %s45 = scalar_select %p42, %s43, %s44
      %p48 = pneg %p42
      %p49 = scmp.eq.s32.totalorder %s12, 1
      %p50 = por %p48, %p49
      %p51 = scmp.ne.s32.totalorder %s43, %s46
      %p52 = scmp.eq.s32.totalorder %s12, 0
      %p53 = por %p51, %p52
      %p54 = scmp.ne.s32.totalorder %s43, %s46
      %p55 = scmp.eq.s32.totalorder %s17, 1
      %p56 = por %p54, %p55
      %p57 = scmp.ne.s32.totalorder %s46, %s47
      %p58 = scmp.eq.s32.totalorder %s17, 0
      %p59 = por %p57, %p58
      %p60 = scmp.ne.s32.totalorder %s46, %s47
      %p61 = scmp.eq.s32.totalorder %s18, 1
      %p62 = por %p60, %p61
      %p64 = scmp.ne.s32.totalorder %s47, %s63
      %p65 = scmp.eq.s32.totalorder %s18, 0
      %p66 = por %p64, %p65
      %s67 = ssub.s32 %s19, %s38
      %p68 = scmp.eq.s32.totalorder %s67, 0
      %s70 = sadd.s32 %s69, 1
      %s71 = scalar_select %p68, %s69, %s70
      %p74 = pneg %p68
      %p75 = scmp.eq.s32.totalorder %s12, 1
      %p76 = por %p74, %p75
      %p77 = scmp.ne.s32.totalorder %s69, %s72
      %p78 = scmp.eq.s32.totalorder %s12, 0
      %p79 = por %p77, %p78
      %p80 = scmp.ne.s32.totalorder %s69, %s72
      %p81 = scmp.eq.s32.totalorder %s17, 1
      %p82 = por %p80, %p81
      %p83 = scmp.ne.s32.totalorder %s72, %s73
      %p84 = scmp.eq.s32.totalorder %s17, 0
      %p85 = por %p83, %p84
      %p86 = scmp.ne.s32.totalorder %s72, %s73
      %p87 = scmp.eq.s32.totalorder %s18, 1
      %p88 = por %p86, %p87
      %p90 = scmp.ne.s32.totalorder %s73, %s89
      %p91 = scmp.eq.s32.totalorder %s18, 0
      %p92 = por %p90, %p91
      %s93 = ssub.s32 %s19, %s38
      %p94 = scmp.eq.s32.totalorder %s93, 0
      %s96 = sadd.s32 %s95, 1
      %s97 = scalar_select %p94, %s95, %s96
      %p100 = pneg %p94
      %p101 = scmp.eq.s32.totalorder %s12, 1
      %p102 = por %p100, %p101
      %p103 = scmp.ne.s32.totalorder %s95, %s98
      %p104 = scmp.eq.s32.totalorder %s12, 0
      %p105 = por %p103, %p104
      %p106 = scmp.ne.s32.totalorder %s95, %s98
      %p107 = scmp.eq.s32.totalorder %s17, 1
      %p108 = por %p106, %p107
      %p109 = scmp.ne.s32.totalorder %s98, %s99
      %p110 = scmp.eq.s32.totalorder %s17, 0
      %p111 = por %p109, %p110
      %p112 = scmp.ne.s32.totalorder %s98, %s99
      %p113 = scmp.eq.s32.totalorder %s18, 1
      %p114 = por %p112, %p113
      %p116 = scmp.ne.s32.totalorder %s99, %s115
      %p117 = scmp.eq.s32.totalorder %s18, 0
      %p118 = por %p116, %p117
      %s119 = smul.u32 %s21, %s20
      %s120 = smul.u32 %s30, %s34
      %s121 = ssub.s32 %s19, %s38
      %s122 = ssub.s32 %s119, %s120
      %s123 = sor.u32 %s121, %s122
      %p124 = scmp.eq.s32.totalorder %s123, 0
      %s126 = sadd.s32 %s125, 1
      %s127 = scalar_select %p124, %s125, %s126
      %p130 = pneg %p124
      %p131 = scmp.eq.s32.totalorder %s12, 1
      %p132 = por %p130, %p131
      %p133 = scmp.ne.s32.totalorder %s125, %s128
      %p134 = scmp.eq.s32.totalorder %s12, 0
      %p135 = por %p133, %p134
      %p136 = scmp.ne.s32.totalorder %s125, %s128
      %p137 = scmp.eq.s32.totalorder %s17, 1
      %p138 = por %p136, %p137
      %p139 = scmp.ne.s32.totalorder %s128, %s129
      %p140 = scmp.eq.s32.totalorder %s17, 0
      %p141 = por %p139, %p140
      %p142 = scmp.ne.s32.totalorder %s128, %s129
      %p143 = scmp.eq.s32.totalorder %s18, 1
      %p144 = por %p142, %p143
      %p146 = scmp.ne.s32.totalorder %s129, %s145
      %p147 = scmp.eq.s32.totalorder %s18, 0
      %p148 = por %p146, %p147
      %p149 = scmp.le.s32.totalorder 1, %s12
      %p150 = scmp.lt.s32.totalorder %s12, 3
      %p151 = pnand %p149, %p150
      %p152 = pneg %p151
      // Predicated region
      $region9: #{tpu_custom_call.1} parent=5 // pred_check
        _
      $region10: #{tpu_custom_call.1} parent=5 // pred_check_branch
        %154 = sbr.rel (%p151) target = $region12
      $region11: #{tpu_custom_call.1} parent=5 // pred_region
        %s155 = ssub.s32 %s12, 1
        // Predicated region
        $region13: #{tpu_custom_call.1} parent=11 // pred_check
          %p156 = pneg %p59
        $region14: #{tpu_custom_call.1} parent=11 // pred_check_branch
          %158 = sbr.rel (%p156) target = $region16
        $region15: #{tpu_custom_call.1} parent=11 // pred_region
          %s159 = smul.u32 2, %s24
          %p160 = scmp.lt.s32.totalorder %s22, 0
          %s161 = scalar_select %p160, %s22, 0
          %p162 = scmp.lt.s32.totalorder %s159, 1
          %s163 = scalar_select %p162, %s159, 1
          %s164 = smul.addr %s161, 2
          %s165 = sadd.s32 %s163, %s164
          %s166 = smul.addr %s165, 4
          %s167 = scalar_lea.vmem %s0, %s166
          %s168 = smul.u32 2, %s24
        $region16: #{tpu_custom_call.1} parent=11 // pred_fallthru
          _
        // Predicated region
        $region17: #{tpu_custom_call.1} parent=11 // pred_check
          %p169 = pneg %p85
        $region18: #{tpu_custom_call.1} parent=11 // pred_check_branch
          %171 = sbr.rel (%p169) target = $region20
        $region19: #{tpu_custom_call.1} parent=11 // pred_region
          %p172 = scmp.lt.s32.totalorder %s22, 0
          %s173 = scalar_select %p172, %s22, 0
          %s174 = smul.addr %s173, 4
          %s175 = scalar_lea.vmem %s1, %s174
        $region20: #{tpu_custom_call.1} parent=11 // pred_fallthru
          _
        // Predicated region
        $region21: #{tpu_custom_call.1} parent=11 // pred_check
          %p176 = pneg %p111
        $region22: #{tpu_custom_call.1} parent=11 // pred_check_branch
          %178 = sbr.rel (%p176) target = $region24
        $region23: #{tpu_custom_call.1} parent=11 // pred_region
          %p179 = scmp.lt.s32.totalorder %s22, 0
          %s180 = scalar_select %p179, %s22, 0
          %s181 = smul.addr %s180, 4
          %s182 = scalar_lea.vmem %s2, %s181
        $region24: #{tpu_custom_call.1} parent=11 // pred_fallthru
          _
      $region12: #{tpu_custom_call.1} parent=5 // pred_fallthru
        _
      %p183 = scmp.lt.s32.totalorder %s12, 2
      // Predicated region
      $region25: #{tpu_custom_call.1} parent=5 // pred_check
        %p184 = pneg %p183
      $region26: #{tpu_custom_call.1} parent=5 // pred_check_branch
        %186 = sbr.rel (%p184) target = $region28
      $region27: #{tpu_custom_call.1} parent=5 // pred_region
        _
      $region28: #{tpu_custom_call.1} parent=5 // pred_fallthru
        _
      %p187 = scmp.le.s32.totalorder 1, %s12
      %p188 = scmp.lt.s32.totalorder %s12, 3
      %p189 = pnand %p187, %p188
      %p190 = pneg %p189
      // Predicated region
      $region29: #{tpu_custom_call.1} parent=5 // pred_check
        _
      $region30: #{tpu_custom_call.1} parent=5 // pred_check_branch
        %192 = sbr.rel (%p189) target = $region32
      $region31: #{tpu_custom_call.1} parent=5 // pred_region
        %s193 = ssub.s32 %s12, 1
        %s194 = smul.u32 2, %s24
        %p195 = scmp.lt.s32.totalorder %s22, 0
        %s196 = scalar_select %p195, %s22, 0
        %p197 = scmp.lt.s32.totalorder %s194, 1
        %s198 = scalar_select %p197, %s194, 1
        %s199 = smul.addr %s196, 2
        %s200 = sadd.s32 %s198, %s199
        %s201 = smul.addr %s200, 4
        %s202 = scalar_lea.vmem %s0, %s201
        %p203 = pneg %p59
        %p204 = pneg %p56
        %p205 = scmp.lt.s32.totalorder %s22, 0
        %s206 = scalar_select %p205, %s22, 0
        %s207 = smul.addr %s206, 4
        %s208 = scalar_lea.vmem %s1, %s207
        %p209 = pneg %p85
        %p210 = pneg %p82
        %p211 = scmp.lt.s32.totalorder %s22, 0
        %s212 = scalar_select %p211, %s22, 0
        %s213 = smul.addr %s212, 4
        %s214 = scalar_lea.vmem %s2, %s213
        %p215 = pneg %p111
        %p216 = pneg %p108
        %p217 = pneg %p141
        %p218 = pneg %p138
        %s219 = sand.u32 %s128, 1
        %s220 = scalar_lea.sflag [#allocation7], %s219
        %s221 = sand.u32 %s128, 1
        %s222 = smul.addr %s221, 16
        %s223 = scalar_lea.vmem [#allocation6], %s222
        %s224 = smul.u32 2, %s24
        %p225 = scmp.lt.s32.totalorder %s22, 0
        %s226 = scalar_select %p225, %s22, 0
        %p227 = scmp.lt.s32.totalorder %s224, 1
        %s228 = scalar_select %p227, %s224, 1
        %s229 = smul.addr %s226, 2
        %s230 = sadd.s32 %s228, %s229
        %s231 = smul.addr %s230, 4
        %s232 = scalar_lea.vmem %s0, %s231
        %s233 = smul.u32 2, %s24
        %p234 = scmp.lt.s32.totalorder %s22, 0
        %s235 = scalar_select %p234, %s22, 0
        %s236 = smul.addr %s235, 4
        %s237 = scalar_lea.vmem %s1, %s236
        %p238 = scmp.lt.s32.totalorder %s22, 0
        %s239 = scalar_select %p238, %s22, 0
        %s240 = smul.addr %s239, 4
        %s241 = scalar_lea.vmem %s2, %s240
        %s242 = smul.u32 %s24, %s23
        %s243 = smul.u32 2, %s242
        %p244 = scmp.eq.s32.totalorder %s23, 0
        %p245 = scmp.eq.s32.totalorder %s24, 0
        %p246 = pnand %p244, %p245
        %p247 = pneg %p246
        // Predicated region
        $region33: #{tpu_custom_call.1} parent=31 // pred_check
          _
        $region34: #{tpu_custom_call.1} parent=31 // pred_check_branch
          %249 = sbr.rel (%p246) target = $region36
        $region35: #{tpu_custom_call.1} parent=31 // pred_region
          %250 = vst [vmem:[#allocation2] sm:$0xf] 0.0
          %251 = vst [vmem:[#allocation3] sm:$0xf] 0.0
        $region36: #{tpu_custom_call.1} parent=31 // pred_fallthru
          _
        // Predicated region
        $region37: #{tpu_custom_call.1} parent=31 // pred_check
          %p252 = pneg %p244
        $region38: #{tpu_custom_call.1} parent=31 // pred_check_branch
          %254 = sbr.rel (%p252) target = $region40
        $region39: #{tpu_custom_call.1} parent=31 // pred_region
          %v255 = vld [vmem:[%s232] sm:$0xff]
          %v256 = vld [vmem:[%s232 + $0x8] sm:$0xff]
          %v259 = vcombine.high %v255, %v255
          %v260 = vcombine.high %v256, %v256
          %vm263 = vcmask 1043456
          %v264 = vsel %vm263, %v255, 0.0
          %v265 = vsel %vm263, %v256, 0.0
          %v266 = vadd.f32 %v264, %v265
          %v267 = vsel %vm263, %v259, 0.0
          %v268 = vsel %vm263, %v260, 0.0
          %v269 = vadd.f32 %v267, %v268
          %v270 = vmul.f32 %v255, %v255
          %v271 = vmul.f32 %v256, %v256
          %v274 = vcombine.high %v270, %v270
          %v275 = vcombine.high %v271, %v271
          %v278 = vsel %vm263, %v270, 0.0
          %v279 = vsel %vm263, %v271, 0.0
          %v280 = vadd.f32 %v278, %v279
          %v281 = vsel %vm263, %v274, 0.0
          %v282 = vsel %vm263, %v275, 0.0
          %v283 = vadd.f32 %v281, %v282
          %v284 = vadd.f32 %v266, %v269
          %v285 = vadd.f32 %v280, %v283
          %v286 = vld [vmem:[#allocation2] sm:$0xf]
          %v287 = vadd.f32 %v286, %v284
          %288 = vst [vmem:[#allocation2] sm:$0xf] %v287
          %v289 = vld [vmem:[#allocation3] sm:$0xf]
          %v290 = vadd.f32 %v289, %v285
          %291 = vst [vmem:[#allocation3] sm:$0xf] %v290
        $region40: #{tpu_custom_call.1} parent=31 // pred_fallthru
          _
        // Predicated region
        $region41: #{tpu_custom_call.1} parent=31 // pred_check
          _
        $region42: #{tpu_custom_call.1} parent=31 // pred_check_branch
          %293 = sbr.rel (%p246) target = $region44
        $region43: #{tpu_custom_call.1} parent=31 // pred_region
          %v294 = vld [vmem:[#allocation2] sm:$0xf]
          %vm295 = vcmask 1043456
          %v296 = vsel %vm295, %v294, 0.0
          %297 = vadd.xlane.f32.xlu0 %v296
          %v298 = vpop.xlane.xlu0 %297
          %v299 = vld [vmem:[#allocation3] sm:$0xf]
          %v300 = vsel %vm295, %v299, 0.0
          %301 = vadd.xlane.f32.xlu0 %v300
          %v302 = vpop.xlane.xlu0 %301
          %v303 = vmul.f32 %v298, 0.001953125
          %v304 = vmul.f32 %v302, 0.001953125
          %v305 = vmul.f32 %v303, %v303
          %v306 = vsub.f32 %v304, %v305
          %v307 = vmax.f32 %v306, 0.0
          %vm308 = vcmask 3072
          %309 = vst.msk [vmem:[#allocation4] sm:$0xf] %vm308, %v303
          %v310 = vadd.f32 %v307, 1e-05
          %v311 = vrsqrt.pop %v310
          %312 = vst.msk [vmem:[#allocation5] sm:$0xf] %vm308, %v311
        $region44: #{tpu_custom_call.1} parent=31 // pred_fallthru
          _
        %p313 = scmp.eq.s32.totalorder %s23, 1
        // Predicated region
        $region45: #{tpu_custom_call.1} parent=31 // pred_check
          %p314 = pneg %p313
        $region46: #{tpu_custom_call.1} parent=31 // pred_check_branch
          %316 = sbr.rel (%p314) target = $region48
        $region47: #{tpu_custom_call.1} parent=31 // pred_region
          %v317 = vld [vmem:[%s232] sm:$0xff]
          %v318 = vld [vmem:[%s232 + $0x8] sm:$0xff]
          %v319 = vld [vmem:[%s237] sm:$0xf]
          %v320 = vld [vmem:[%s237 + $0x4] sm:$0xf]
          %v321 = vld [vmem:[%s241] sm:$0xf]
          %v322 = vld [vmem:[%s241 + $0x4] sm:$0xf]
          %v323 = vld [vmem:[#allocation5] sm:$0xf]
          %v324 = vmul.f32 %v319, %v323
          %v325 = vmul.f32 %v320, %v323
          %v326 = vld [vmem:[#allocation4] sm:$0xf]
          %v327 = vmul.f32 %v326, %v324
          %v328 = vmul.f32 %v326, %v325
          %v329 = vsub.f32 %v321, %v327
          %v330 = vsub.f32 %v322, %v328
          %332 = vset.pattern.permute.xlu0 0
          %333 = vperm.xlu0 %332, %v324
          %v334 = vpop.permute.xlu0 %333
          %336 = vset.pattern.permute.xlu0 0
          %337 = vperm.xlu0 %336, %v325
          %v338 = vpop.permute.xlu0 %337
          %v340 = vunpack.c.l.s4 839922192
          %v341 = vunpack.c.0.s8 %v340
          %v342 = vlaneseq
          %v343 = vshrl.u32 %v342, 7
          %v344 = vsub.s32 %v341, %v343
          %v345 = vrot.slane %v334, %v344
          %v347 = vunpack.c.l.s4 839922192
          %v348 = vunpack.c.0.s8 %v347
          %v349 = vlaneseq
          %v350 = vshrl.u32 %v349, 7
          %v351 = vsub.s32 %v348, %v350
          %v352 = vrot.slane %v338, %v351
          %v355 = vmul.f32 %v317, %v345
          %v356 = vmul.f32 %v318, %v352
          %358 = vset.pattern.permute.xlu0 0
          %359 = vperm.xlu0 %358, %v329
          %v360 = vpop.permute.xlu0 %359
          %362 = vset.pattern.permute.xlu0 0
          %363 = vperm.xlu0 %362, %v330
          %v364 = vpop.permute.xlu0 %363
          %v366 = vunpack.c.l.s4 839922192
          %v367 = vunpack.c.0.s8 %v366
          %v368 = vlaneseq
          %v369 = vshrl.u32 %v368, 7
          %v370 = vsub.s32 %v367, %v369
          %v371 = vrot.slane %v360, %v370
          %v373 = vunpack.c.l.s4 839922192
          %v374 = vunpack.c.0.s8 %v373
          %v375 = vlaneseq
          %v376 = vshrl.u32 %v375, 7
          %v377 = vsub.s32 %v374, %v376
          %v378 = vrot.slane %v364, %v377
          %v381 = vadd.f32 %v355, %v371
          %v382 = vadd.f32 %v356, %v378
          %383 = vst [vmem:[%s223] sm:$0xff] %v381
          %384 = vst [vmem:[%s223 + $0x8] sm:$0xff] %v382
        $region48: #{tpu_custom_call.1} parent=31 // pred_fallthru
          _
        %s385 = sand.u32 %s128, 1
        %s386 = scalar_lea.sflag [#allocation7], %s385
        %s387 = sand.u32 %s128, 1
        %s388 = smul.addr %s387, 16
        %s389 = scalar_lea.vmem [#allocation6], %s388
        // Predicated region
        $region49: #{tpu_custom_call.1} parent=31 // pred_check
          %p390 = pneg %p138
        $region50: #{tpu_custom_call.1} parent=31 // pred_check_branch
          %392 = sbr.rel (%p390) target = $region52
        $region51: #{tpu_custom_call.1} parent=31 // pred_region
          %s393 = smul.u32 %s24, %s23
          %s394 = smul.u32 2, %s393
          %s396 = ssub.s32 256, 256
          %397 = vsyncadd %s386, %s396
          %s398 = smul.addr %s22, 2
          %s399 = sadd.s32 %s394, %s398
          %s400 = smul.addr %s399, 64
          %s401 = scalar_lea.hbm %s3, %s400
          %s402 = sshll.u32 %s389, 4
          %s403 = int_to_ptr.vmem [resolvable:$true] %s402
          %408 = dma.vmem_to_hbm [thread:$0]  %s403, 256, %s401, %s386, 128, 128, 8
        $region52: #{tpu_custom_call.1} parent=31 // pred_fallthru
          _
      $region32: #{tpu_custom_call.1} parent=5 // pred_fallthru
        _
      %p409 = scmp.le.s32.totalorder 2, %s12
      // Predicated region
      $region53: #{tpu_custom_call.1} parent=5 // pred_check
        %p410 = pneg %p409
      $region54: #{tpu_custom_call.1} parent=5 // pred_check_branch
        %412 = sbr.rel (%p410) target = $region56
      $region55: #{tpu_custom_call.1} parent=5 // pred_region
        %s413 = ssub.s32 %s12, 2
        // Predicated region
        $region57: #{tpu_custom_call.1} parent=55 // pred_check
          %p414 = pneg %p144
        $region58: #{tpu_custom_call.1} parent=55 // pred_check_branch
          %416 = sbr.rel (%p414) target = $region60
        $region59: #{tpu_custom_call.1} parent=55 // pred_region
          %s417 = sand.u32 %s129, 1
          %s418 = scalar_lea.sflag [#allocation7], %s417
          %s419 = sand.u32 %s129, 1
          %s420 = smul.addr %s419, 16
          %s421 = scalar_lea.vmem [#allocation6], %s420
          %422 = dma.done %s418, 256
        $region60: #{tpu_custom_call.1} parent=55 // pred_fallthru
          _
      $region56: #{tpu_custom_call.1} parent=5 // pred_fallthru
        _
    $region6: #{tpu_custom_call.1} parent=1 // loop_footer
      %s16 = sadd.s32 1, %s12
    $region7: #{tpu_custom_call.1} parent=1 // loop_footer_branch
      %11 = sbr.rel target = $region3
    $region8: #{tpu_custom_call.1} parent=1 // loop_exit
      _
    %423 = vsyncpa [#allocation7], 1
    %s424 = scalar_lea.sflag [#allocation7], 1
    %425 = vsyncpa %s424, 1

</llo_original>
